<compile_context>
chip_gen: v7x
topology: tpu7x:2x2x1
jax: 0.10.0
libtpu: 0.0.40
codegen_flags: <defaults>
</compile_context>

<pallas_src>
import jax
import jax.numpy as jnp
import numpy as np
from jax.experimental import pallas as pl


# ----------------------------- pack layout --------------------------------
def _round_up(n, m):
    return ((n + m - 1) // m) * m


def _pack_offsets(I, H):
    """Row offsets (all multiples of 8) of each section in the weight pack."""
    r_ih = 0                                # W_ih   : (I, 4H)
    r_hh = _round_up(I, 8)                  # W_hh   : (H, 4H)
    r_b = r_hh + _round_up(H, 8)            # bias   : (1, 4H)   (b_ih + b_hh)
    r_fc = r_b + 8                          # W_fc   : (H, 4H)   (O real cols)
    r_bfc = r_fc + _round_up(H, 8)          # b_fc   : (1, 4H)   (O real cols)
    total = r_bfc + 8
    return r_ih, r_hh, r_b, r_fc, r_bfc, total


# ----------------------------- Pallas kernel -------------------------------
def lstm_fc_kernel(x_ref, hc0_ref, w_ref, y_ref, hc_ref):
    """Whole sequence in one invocation; recurrence is a static unrolled loop.

    x_ref   : (S*B, I)  time-major flattened input
    hc0_ref : (2*B, H)  [h0 ; c0] stacked on the sublane axis
    w_ref   : (R, 4H)   packed weights (see _pack_offsets)
    y_ref   : (S*B, 4H) fc output, lane-dense (real output in lanes [:O])
    hc_ref  : (2*B, H)  [h_n ; c_n]
    """
    SB, I = x_ref.shape
    B2, H = hc0_ref.shape
    B = B2 // 2
    S = SB // B

    r_ih, r_hh, r_b, r_fc, r_bfc, _ = _pack_offsets(I, H)

    # Static ref slices of the single packed weight array (one input DMA).
    w_ih = w_ref[r_ih:r_ih + I, :]            # (I, 4H)
    w_hh = w_ref[r_hh:r_hh + H, :]            # (H, 4H)
    b = w_ref[r_b:r_b + 1, :]                 # (1, 4H)
    w_fc = w_ref[r_fc:r_fc + H, :]            # (H, 4H), zero-padded beyond O
    b_fc = w_ref[r_bfc:r_bfc + 1, :]          # (1, 4H), zero-padded beyond O

    # Hoisted input projection for all timesteps: one MXU pass, time-major.
    gx = jnp.dot(x_ref[...], w_ih, preferred_element_type=jnp.float32) + b  # (S*B, 4H)

    h = hc0_ref[0:B, :]                       # (B, H) carried in vregs
    c = hc0_ref[B:2 * B, :]                   # (B, H)

    hs = []                                   # per-step h stays in vregs
    # Static, fully unrolled time loop (S known at trace time, small).
    for t in range(S):
        # gates ordered [i, f, g, o] as in PyTorch; contiguous sublane slice.
        gates = gx[t * B:(t + 1) * B, :] + jnp.dot(
            h, w_hh, preferred_element_type=jnp.float32)                    # (B, 4H)
        sg = jax.nn.sigmoid(gates)            # EUP activation over full vreg
        i_g = sg[:, 0 * H:1 * H]
        f_g = sg[:, 1 * H:2 * H]
        o_g = sg[:, 3 * H:4 * H]
        g_g = jnp.tanh(gates[:, 2 * H:3 * H])

        c = f_g * c + i_g * g_g
        h = o_g * jnp.tanh(c)
        hs.append(h)

    # Deferred FC head: single concat (vregs only) + one matmul + one lane-dense store.
    h_all = jnp.concatenate(hs, axis=0)       # (S*B, H) time-major
    y_ref[...] = jnp.dot(h_all, w_fc, preferred_element_type=jnp.float32) + b_fc

    # Final hidden state, written once, packed into one output.
    hc_ref[...] = jnp.concatenate([h, c], axis=0)


# ------------------------------- wrapper -----------------------------------
def pack_params(pt, input_size, hidden_size, output_size):
    """Pack PyTorch-layout parameters into one (R, 4H) array."""
    I, H, O = input_size, hidden_size, output_size
    G = 4 * H
    assert O <= G, "output_size must fit in the 4H-wide FC pad"
    r_ih, r_hh, r_b, r_fc, r_bfc, total = _pack_offsets(I, H)
    w = np.zeros((total, G), np.float32)
    w[r_ih:r_ih + I, :] = np.asarray(pt["weight_ih"]).T                 # (I, 4H)
    w[r_hh:r_hh + H, :] = np.asarray(pt["weight_hh"]).T                 # (H, 4H)
    w[r_b, :] = np.asarray(pt["bias_ih"]) + np.asarray(pt["bias_hh"])   # (4H,)
    w[r_fc:r_fc + H, :O] = np.asarray(pt["fc_weight"]).T                # (H, O)
    w[r_bfc, :O] = np.asarray(pt["fc_bias"])                            # (O,)
    return jnp.asarray(w)


def model_forward(x, hidden, w_pack, output_size):
    """x: (B, S, I) float32; hidden: (h0, c0) each (n_layers=1, B, H)."""
    h0, c0 = hidden
    B, S, I = x.shape
    H = h0.shape[-1]
    O = output_size
    G = 4 * H

    # Layout plumbing in the wrapper (not on the kernel's serial path):
    x_tm = jnp.transpose(x, (1, 0, 2)).reshape(S * B, I)   # time-major flatten
    hc0 = jnp.concatenate([h0[0], c0[0]], axis=0)          # (2B, H)

    y_full, hc = pl.pallas_call(
        lstm_fc_kernel,
        out_shape=(jax.ShapeDtypeStruct((S * B, G), jnp.float32),   # lane-dense fc out
                   jax.ShapeDtypeStruct((2 * B, H), jnp.float32)),  # [h_n ; c_n]
    )(x_tm, hc0, w_pack)

    # Slice to O and reorder to PyTorch's batch-major .view(-1, H) ordering.
    y = y_full[:, :O].reshape(S, B, O).transpose(1, 0, 2).reshape(B * S, O)
    hn = hc[0:B][None]
    cn = hc[B:2 * B][None]
    return y, (hn, cn)


# --------------------------- pure-JAX reference -----------------------------
def ref_forward(x, hidden, pt):
    w_ih, w_hh, b_ih, b_hh, w_fc, b_fc = (pt["weight_ih"], pt["weight_hh"],
                                          pt["bias_ih"], pt["bias_hh"],
                                          pt["fc_weight"], pt["fc_bias"])
    B, S, I = x.shape
    H = w_hh.shape[1]
    h, c = hidden[0][0], hidden[1][0]
    ys = []
    for t in range(S):
        gates = x[:, t] @ w_ih.T + b_ih + h @ w_hh.T + b_hh
        i = jax.nn.sigmoid(gates[:, 0 * H:1 * H])
        f = jax.nn.sigmoid(gates[:, 1 * H:2 * H])
        g = jnp.tanh(gates[:, 2 * H:3 * H])
        o = jax.nn.sigmoid(gates[:, 3 * H:4 * H])
        c = f * c + i * g
        h = o * jnp.tanh(c)
        ys.append(h)
    lstm_out = jnp.stack(ys, axis=1)                       # (B, S, H)
    out = lstm_out.reshape(B * S, H) @ w_fc.T + b_fc
    return out, (h[None], c[None])


# --------------------------------- main -------------------------------------
if __name__ == "__main__":
    input_size, output_size, hidden_size, n_layers = 4, 4, 32, 1
    B, S = 2, 8

    key = jax.random.PRNGKey(0)
    ks = jax.random.split(key, 8)
    bound = 1.0 / np.sqrt(hidden_size)
    u = lambda k, shape: jax.random.uniform(k, shape, jnp.float32, -bound, bound)

    # PyTorch-layout parameters (deterministic synthetic init).
    pt = {
        "weight_ih": u(ks[0], (4 * hidden_size, input_size)),
        "weight_hh": u(ks[1], (4 * hidden_size, hidden_size)),
        "bias_ih":   u(ks[2], (4 * hidden_size,)),
        "bias_hh":   u(ks[3], (4 * hidden_size,)),
        "fc_weight": u(ks[4], (output_size, hidden_size)),
        "fc_bias":   u(ks[5], (output_size,)),
    }
    # Single packed kernel-layout parameter array (one input DMA).
    w_pack = pack_params(pt, input_size, hidden_size, output_size)

    x = jax.random.normal(ks[6], (B, S, input_size), jnp.float32)
    hidden = (jnp.zeros((n_layers, B, hidden_size), jnp.float32),
              jnp.zeros((n_layers, B, hidden_size), jnp.float32))

    out, (hn, cn) = model_forward(x, hidden, w_pack, output_size)
    jax.block_until_ready((out, hn, cn))

    ref_out, (ref_hn, ref_cn) = ref_forward(x, hidden, pt)
    assert out.shape == (B * S, output_size)
    assert hn.shape == (n_layers, B, hidden_size)
    np.testing.assert_allclose(np.asarray(out), np.asarray(ref_out), atol=1e-5, rtol=1e-5)
    np.testing.assert_allclose(np.asarray(hn), np.asarray(ref_hn), atol=1e-5, rtol=1e-5)
    np.testing.assert_allclose(np.asarray(cn), np.asarray(ref_cn), atol=1e-5, rtol=1e-5)

    print("KERNEL_OK")
</pallas_src>

<mosaic_0001>
module attributes {stable_mosaic.version = 11 : i64} {
  func.func @lstm_fc_kernel(%arg0: memref<16x4xf32, #tpu.memory_space<vmem>>, %arg1: memref<4x32xf32, #tpu.memory_space<vmem>>, %arg2: memref<88x128xf32, #tpu.memory_space<vmem>>, %arg3: memref<16x128xf32, #tpu.memory_space<vmem>>, %arg4: memref<4x32xf32, #tpu.memory_space<vmem>>) attributes {dimension_semantics = [], scalar_prefetch = 0 : i64, scratch_operands = 0 : i64, tpu.core_type = #tpu.core_type<tc>} {
    %c0 = arith.constant 0 : index
    %c0_0 = arith.constant 0 : index
    %0 = vector.load %arg2[%c0, %c0_0] : memref<88x128xf32, #tpu.memory_space<vmem>>, vector<4x128xf32>
    %c8 = arith.constant 8 : index
    %c0_1 = arith.constant 0 : index
    %1 = vector.load %arg2[%c8, %c0_1] : memref<88x128xf32, #tpu.memory_space<vmem>>, vector<32x128xf32>
    %c40 = arith.constant 40 : index
    %c0_2 = arith.constant 0 : index
    %2 = vector.load %arg2[%c40, %c0_2] : memref<88x128xf32, #tpu.memory_space<vmem>>, vector<1x128xf32>
    %c48 = arith.constant 48 : index
    %c0_3 = arith.constant 0 : index
    %3 = vector.load %arg2[%c48, %c0_3] : memref<88x128xf32, #tpu.memory_space<vmem>>, vector<32x128xf32>
    %c80 = arith.constant 80 : index
    %c0_4 = arith.constant 0 : index
    %4 = vector.load %arg2[%c80, %c0_4] : memref<88x128xf32, #tpu.memory_space<vmem>>, vector<1x128xf32>
    %c0_5 = arith.constant 0 : index
    %c0_6 = arith.constant 0 : index
    %5 = vector.load %arg0[%c0_5, %c0_6] : memref<16x4xf32, #tpu.memory_space<vmem>>, vector<16x4xf32>
    %cst = arith.constant dense<0.000000e+00> : vector<16x128xf32>
    %6 = tpu.matmul %5, %0, %cst {dimension_numbers = #tpu.dot_dimension_numbers<[1], [0], [0], [1], [0, 0, 1, 1], [], []>} : vector<16x4xf32>, vector<4x128xf32>, vector<16x128xf32> -> vector<16x128xf32>
    %7 = vector.broadcast %2 : vector<1x128xf32> to vector<16x128xf32>
    %8 = arith.addf %6, %7 : vector<16x128xf32>
    %c0_7 = arith.constant 0 : index
    %c0_8 = arith.constant 0 : index
    %9 = vector.load %arg1[%c0_7, %c0_8] : memref<4x32xf32, #tpu.memory_space<vmem>>, vector<2x32xf32>
    %c2 = arith.constant 2 : index
    %c0_9 = arith.constant 0 : index
    %10 = vector.load %arg1[%c2, %c0_9] : memref<4x32xf32, #tpu.memory_space<vmem>>, vector<2x32xf32>
    %11 = vector.extract_strided_slice %8 {offsets = [0, 0], sizes = [2, 128], strides = [1, 1]} : vector<16x128xf32> to vector<2x128xf32>
    %cst_10 = arith.constant dense<0.000000e+00> : vector<2x128xf32>
    %12 = tpu.matmul %9, %1, %cst_10 {dimension_numbers = #tpu.dot_dimension_numbers<[1], [0], [0], [1], [0, 0, 1, 1], [], []>} : vector<2x32xf32>, vector<32x128xf32>, vector<2x128xf32> -> vector<2x128xf32>
    %13 = arith.addf %11, %12 : vector<2x128xf32>
    %14 = arith.negf %13 : vector<2x128xf32>
    %15 = math.exp %14 : vector<2x128xf32>
    %cst_11 = arith.constant 1.000000e+00 : f32
    %16 = vector.broadcast %cst_11 : f32 to vector<2x128xf32>
    %17 = arith.addf %16, %15 : vector<2x128xf32>
    %18 = arith.divf %16, %17 : vector<2x128xf32>
    %19 = vector.extract_strided_slice %18 {offsets = [0, 0], sizes = [2, 32], strides = [1, 1]} : vector<2x128xf32> to vector<2x32xf32>
    %20 = vector.extract_strided_slice %18 {offsets = [0, 32], sizes = [2, 32], strides = [1, 1]} : vector<2x128xf32> to vector<2x32xf32>
    %21 = vector.extract_strided_slice %18 {offsets = [0, 96], sizes = [2, 32], strides = [1, 1]} : vector<2x128xf32> to vector<2x32xf32>
    %22 = vector.extract_strided_slice %13 {offsets = [0, 64], sizes = [2, 32], strides = [1, 1]} : vector<2x128xf32> to vector<2x32xf32>
    %23 = math.tanh %22 : vector<2x32xf32>
    %24 = arith.mulf %20, %10 : vector<2x32xf32>
    %25 = arith.mulf %19, %23 : vector<2x32xf32>
    %26 = arith.addf %24, %25 : vector<2x32xf32>
    %27 = math.tanh %26 : vector<2x32xf32>
    %28 = arith.mulf %21, %27 : vector<2x32xf32>
    %29 = vector.extract_strided_slice %8 {offsets = [2, 0], sizes = [2, 128], strides = [1, 1]} : vector<16x128xf32> to vector<2x128xf32>
    %cst_12 = arith.constant dense<0.000000e+00> : vector<2x128xf32>
    %30 = tpu.matmul %28, %1, %cst_12 {dimension_numbers = #tpu.dot_dimension_numbers<[1], [0], [0], [1], [0, 0, 1, 1], [], []>} : vector<2x32xf32>, vector<32x128xf32>, vector<2x128xf32> -> vector<2x128xf32>
    %31 = arith.addf %29, %30 : vector<2x128xf32>
    %32 = arith.negf %31 : vector<2x128xf32>
    %33 = math.exp %32 : vector<2x128xf32>
    %cst_13 = arith.constant 1.000000e+00 : f32
    %34 = vector.broadcast %cst_13 : f32 to vector<2x128xf32>
    %35 = arith.addf %34, %33 : vector<2x128xf32>
    %36 = arith.divf %34, %35 : vector<2x128xf32>
    %37 = vector.extract_strided_slice %36 {offsets = [0, 0], sizes = [2, 32], strides = [1, 1]} : vector<2x128xf32> to vector<2x32xf32>
    %38 = vector.extract_strided_slice %36 {offsets = [0, 32], sizes = [2, 32], strides = [1, 1]} : vector<2x128xf32> to vector<2x32xf32>
    %39 = vector.extract_strided_slice %36 {offsets = [0, 96], sizes = [2, 32], strides = [1, 1]} : vector<2x128xf32> to vector<2x32xf32>
    %40 = vector.extract_strided_slice %31 {offsets = [0, 64], sizes = [2, 32], strides = [1, 1]} : vector<2x128xf32> to vector<2x32xf32>
    %41 = math.tanh %40 : vector<2x32xf32>
    %42 = arith.mulf %38, %26 : vector<2x32xf32>
    %43 = arith.mulf %37, %41 : vector<2x32xf32>
    %44 = arith.addf %42, %43 : vector<2x32xf32>
    %45 = math.tanh %44 : vector<2x32xf32>
    %46 = arith.mulf %39, %45 : vector<2x32xf32>
    %47 = vector.extract_strided_slice %8 {offsets = [4, 0], sizes = [2, 128], strides = [1, 1]} : vector<16x128xf32> to vector<2x128xf32>
    %cst_14 = arith.constant dense<0.000000e+00> : vector<2x128xf32>
    %48 = tpu.matmul %46, %1, %cst_14 {dimension_numbers = #tpu.dot_dimension_numbers<[1], [0], [0], [1], [0, 0, 1, 1], [], []>} : vector<2x32xf32>, vector<32x128xf32>, vector<2x128xf32> -> vector<2x128xf32>
    %49 = arith.addf %47, %48 : vector<2x128xf32>
    %50 = arith.negf %49 : vector<2x128xf32>
    %51 = math.exp %50 : vector<2x128xf32>
    %cst_15 = arith.constant 1.000000e+00 : f32
    %52 = vector.broadcast %cst_15 : f32 to vector<2x128xf32>
    %53 = arith.addf %52, %51 : vector<2x128xf32>
    %54 = arith.divf %52, %53 : vector<2x128xf32>
    %55 = vector.extract_strided_slice %54 {offsets = [0, 0], sizes = [2, 32], strides = [1, 1]} : vector<2x128xf32> to vector<2x32xf32>
    %56 = vector.extract_strided_slice %54 {offsets = [0, 32], sizes = [2, 32], strides = [1, 1]} : vector<2x128xf32> to vector<2x32xf32>
    %57 = vector.extract_strided_slice %54 {offsets = [0, 96], sizes = [2, 32], strides = [1, 1]} : vector<2x128xf32> to vector<2x32xf32>
    %58 = vector.extract_strided_slice %49 {offsets = [0, 64], sizes = [2, 32], strides = [1, 1]} : vector<2x128xf32> to vector<2x32xf32>
    %59 = math.tanh %58 : vector<2x32xf32>
    %60 = arith.mulf %56, %44 : vector<2x32xf32>
    %61 = arith.mulf %55, %59 : vector<2x32xf32>
    %62 = arith.addf %60, %61 : vector<2x32xf32>
    %63 = math.tanh %62 : vector<2x32xf32>
    %64 = arith.mulf %57, %63 : vector<2x32xf32>
    %65 = vector.extract_strided_slice %8 {offsets = [6, 0], sizes = [2, 128], strides = [1, 1]} : vector<16x128xf32> to vector<2x128xf32>
    %cst_16 = arith.constant dense<0.000000e+00> : vector<2x128xf32>
    %66 = tpu.matmul %64, %1, %cst_16 {dimension_numbers = #tpu.dot_dimension_numbers<[1], [0], [0], [1], [0, 0, 1, 1], [], []>} : vector<2x32xf32>, vector<32x128xf32>, vector<2x128xf32> -> vector<2x128xf32>
    %67 = arith.addf %65, %66 : vector<2x128xf32>
    %68 = arith.negf %67 : vector<2x128xf32>
    %69 = math.exp %68 : vector<2x128xf32>
    %cst_17 = arith.constant 1.000000e+00 : f32
    %70 = vector.broadcast %cst_17 : f32 to vector<2x128xf32>
    %71 = arith.addf %70, %69 : vector<2x128xf32>
    %72 = arith.divf %70, %71 : vector<2x128xf32>
    %73 = vector.extract_strided_slice %72 {offsets = [0, 0], sizes = [2, 32], strides = [1, 1]} : vector<2x128xf32> to vector<2x32xf32>
    %74 = vector.extract_strided_slice %72 {offsets = [0, 32], sizes = [2, 32], strides = [1, 1]} : vector<2x128xf32> to vector<2x32xf32>
    %75 = vector.extract_strided_slice %72 {offsets = [0, 96], sizes = [2, 32], strides = [1, 1]} : vector<2x128xf32> to vector<2x32xf32>
    %76 = vector.extract_strided_slice %67 {offsets = [0, 64], sizes = [2, 32], strides = [1, 1]} : vector<2x128xf32> to vector<2x32xf32>
    %77 = math.tanh %76 : vector<2x32xf32>
    %78 = arith.mulf %74, %62 : vector<2x32xf32>
    %79 = arith.mulf %73, %77 : vector<2x32xf32>
    %80 = arith.addf %78, %79 : vector<2x32xf32>
    %81 = math.tanh %80 : vector<2x32xf32>
    %82 = arith.mulf %75, %81 : vector<2x32xf32>
    %83 = vector.extract_strided_slice %8 {offsets = [8, 0], sizes = [2, 128], strides = [1, 1]} : vector<16x128xf32> to vector<2x128xf32>
    %cst_18 = arith.constant dense<0.000000e+00> : vector<2x128xf32>
    %84 = tpu.matmul %82, %1, %cst_18 {dimension_numbers = #tpu.dot_dimension_numbers<[1], [0], [0], [1], [0, 0, 1, 1], [], []>} : vector<2x32xf32>, vector<32x128xf32>, vector<2x128xf32> -> vector<2x128xf32>
    %85 = arith.addf %83, %84 : vector<2x128xf32>
    %86 = arith.negf %85 : vector<2x128xf32>
    %87 = math.exp %86 : vector<2x128xf32>
    %cst_19 = arith.constant 1.000000e+00 : f32
    %88 = vector.broadcast %cst_19 : f32 to vector<2x128xf32>
    %89 = arith.addf %88, %87 : vector<2x128xf32>
    %90 = arith.divf %88, %89 : vector<2x128xf32>
    %91 = vector.extract_strided_slice %90 {offsets = [0, 0], sizes = [2, 32], strides = [1, 1]} : vector<2x128xf32> to vector<2x32xf32>
    %92 = vector.extract_strided_slice %90 {offsets = [0, 32], sizes = [2, 32], strides = [1, 1]} : vector<2x128xf32> to vector<2x32xf32>
    %93 = vector.extract_strided_slice %90 {offsets = [0, 96], sizes = [2, 32], strides = [1, 1]} : vector<2x128xf32> to vector<2x32xf32>
    %94 = vector.extract_strided_slice %85 {offsets = [0, 64], sizes = [2, 32], strides = [1, 1]} : vector<2x128xf32> to vector<2x32xf32>
    %95 = math.tanh %94 : vector<2x32xf32>
    %96 = arith.mulf %92, %80 : vector<2x32xf32>
    %97 = arith.mulf %91, %95 : vector<2x32xf32>
    %98 = arith.addf %96, %97 : vector<2x32xf32>
    %99 = math.tanh %98 : vector<2x32xf32>
    %100 = arith.mulf %93, %99 : vector<2x32xf32>
    %101 = vector.extract_strided_slice %8 {offsets = [10, 0], sizes = [2, 128], strides = [1, 1]} : vector<16x128xf32> to vector<2x128xf32>
    %cst_20 = arith.constant dense<0.000000e+00> : vector<2x128xf32>
    %102 = tpu.matmul %100, %1, %cst_20 {dimension_numbers = #tpu.dot_dimension_numbers<[1], [0], [0], [1], [0, 0, 1, 1], [], []>} : vector<2x32xf32>, vector<32x128xf32>, vector<2x128xf32> -> vector<2x128xf32>
    %103 = arith.addf %101, %102 : vector<2x128xf32>
    %104 = arith.negf %103 : vector<2x128xf32>
    %105 = math.exp %104 : vector<2x128xf32>
    %cst_21 = arith.constant 1.000000e+00 : f32
    %106 = vector.broadcast %cst_21 : f32 to vector<2x128xf32>
    %107 = arith.addf %106, %105 : vector<2x128xf32>
    %108 = arith.divf %106, %107 : vector<2x128xf32>
    %109 = vector.extract_strided_slice %108 {offsets = [0, 0], sizes = [2, 32], strides = [1, 1]} : vector<2x128xf32> to vector<2x32xf32>
    %110 = vector.extract_strided_slice %108 {offsets = [0, 32], sizes = [2, 32], strides = [1, 1]} : vector<2x128xf32> to vector<2x32xf32>
    %111 = vector.extract_strided_slice %108 {offsets = [0, 96], sizes = [2, 32], strides = [1, 1]} : vector<2x128xf32> to vector<2x32xf32>
    %112 = vector.extract_strided_slice %103 {offsets = [0, 64], sizes = [2, 32], strides = [1, 1]} : vector<2x128xf32> to vector<2x32xf32>
    %113 = math.tanh %112 : vector<2x32xf32>
    %114 = arith.mulf %110, %98 : vector<2x32xf32>
    %115 = arith.mulf %109, %113 : vector<2x32xf32>
    %116 = arith.addf %114, %115 : vector<2x32xf32>
    %117 = math.tanh %116 : vector<2x32xf32>
    %118 = arith.mulf %111, %117 : vector<2x32xf32>
    %119 = vector.extract_strided_slice %8 {offsets = [12, 0], sizes = [2, 128], strides = [1, 1]} : vector<16x128xf32> to vector<2x128xf32>
    %cst_22 = arith.constant dense<0.000000e+00> : vector<2x128xf32>
    %120 = tpu.matmul %118, %1, %cst_22 {dimension_numbers = #tpu.dot_dimension_numbers<[1], [0], [0], [1], [0, 0, 1, 1], [], []>} : vector<2x32xf32>, vector<32x128xf32>, vector<2x128xf32> -> vector<2x128xf32>
    %121 = arith.addf %119, %120 : vector<2x128xf32>
    %122 = arith.negf %121 : vector<2x128xf32>
    %123 = math.exp %122 : vector<2x128xf32>
    %cst_23 = arith.constant 1.000000e+00 : f32
    %124 = vector.broadcast %cst_23 : f32 to vector<2x128xf32>
    %125 = arith.addf %124, %123 : vector<2x128xf32>
    %126 = arith.divf %124, %125 : vector<2x128xf32>
    %127 = vector.extract_strided_slice %126 {offsets = [0, 0], sizes = [2, 32], strides = [1, 1]} : vector<2x128xf32> to vector<2x32xf32>
    %128 = vector.extract_strided_slice %126 {offsets = [0, 32], sizes = [2, 32], strides = [1, 1]} : vector<2x128xf32> to vector<2x32xf32>
    %129 = vector.extract_strided_slice %126 {offsets = [0, 96], sizes = [2, 32], strides = [1, 1]} : vector<2x128xf32> to vector<2x32xf32>
    %130 = vector.extract_strided_slice %121 {offsets = [0, 64], sizes = [2, 32], strides = [1, 1]} : vector<2x128xf32> to vector<2x32xf32>
    %131 = math.tanh %130 : vector<2x32xf32>
    %132 = arith.mulf %128, %116 : vector<2x32xf32>
    %133 = arith.mulf %127, %131 : vector<2x32xf32>
    %134 = arith.addf %132, %133 : vector<2x32xf32>
    %135 = math.tanh %134 : vector<2x32xf32>
    %136 = arith.mulf %129, %135 : vector<2x32xf32>
    %137 = vector.extract_strided_slice %8 {offsets = [14, 0], sizes = [2, 128], strides = [1, 1]} : vector<16x128xf32> to vector<2x128xf32>
    %cst_24 = arith.constant dense<0.000000e+00> : vector<2x128xf32>
    %138 = tpu.matmul %136, %1, %cst_24 {dimension_numbers = #tpu.dot_dimension_numbers<[1], [0], [0], [1], [0, 0, 1, 1], [], []>} : vector<2x32xf32>, vector<32x128xf32>, vector<2x128xf32> -> vector<2x128xf32>
    %139 = arith.addf %137, %138 : vector<2x128xf32>
    %140 = arith.negf %139 : vector<2x128xf32>
    %141 = math.exp %140 : vector<2x128xf32>
    %cst_25 = arith.constant 1.000000e+00 : f32
    %142 = vector.broadcast %cst_25 : f32 to vector<2x128xf32>
    %143 = arith.addf %142, %141 : vector<2x128xf32>
    %144 = arith.divf %142, %143 : vector<2x128xf32>
    %145 = vector.extract_strided_slice %144 {offsets = [0, 0], sizes = [2, 32], strides = [1, 1]} : vector<2x128xf32> to vector<2x32xf32>
    %146 = vector.extract_strided_slice %144 {offsets = [0, 32], sizes = [2, 32], strides = [1, 1]} : vector<2x128xf32> to vector<2x32xf32>
    %147 = vector.extract_strided_slice %144 {offsets = [0, 96], sizes = [2, 32], strides = [1, 1]} : vector<2x128xf32> to vector<2x32xf32>
    %148 = vector.extract_strided_slice %139 {offsets = [0, 64], sizes = [2, 32], strides = [1, 1]} : vector<2x128xf32> to vector<2x32xf32>
    %149 = math.tanh %148 : vector<2x32xf32>
    %150 = arith.mulf %146, %134 : vector<2x32xf32>
    %151 = arith.mulf %145, %149 : vector<2x32xf32>
    %152 = arith.addf %150, %151 : vector<2x32xf32>
    %153 = math.tanh %152 : vector<2x32xf32>
    %154 = arith.mulf %147, %153 : vector<2x32xf32>
    %155 = tpu.concatenate %28, %46, %64, %82, %100, %118, %136, %154 in 0 : vector<2x32xf32>, vector<2x32xf32>, vector<2x32xf32>, vector<2x32xf32>, vector<2x32xf32>, vector<2x32xf32>, vector<2x32xf32>, vector<2x32xf32> -> vector<16x32xf32>
    %cst_26 = arith.constant dense<0.000000e+00> : vector<16x128xf32>
    %156 = tpu.matmul %155, %3, %cst_26 {dimension_numbers = #tpu.dot_dimension_numbers<[1], [0], [0], [1], [0, 0, 1, 1], [], []>} : vector<16x32xf32>, vector<32x128xf32>, vector<16x128xf32> -> vector<16x128xf32>
    %157 = vector.broadcast %4 : vector<1x128xf32> to vector<16x128xf32>
    %158 = arith.addf %156, %157 : vector<16x128xf32>
    %c0_27 = arith.constant 0 : index
    %c0_28 = arith.constant 0 : index
    %159 = vector.load %arg3[%c0_27, %c0_28] : memref<16x128xf32, #tpu.memory_space<vmem>>, vector<16x128xf32>
    tpu.vector_store %arg3[%c0_27, %c0_28], %158 {strides = array<i32>} : memref<16x128xf32, #tpu.memory_space<vmem>>, vector<16x128xf32>,
    %160 = tpu.concatenate %154, %152 in 0 : vector<2x32xf32>, vector<2x32xf32> -> vector<4x32xf32>
    %c0_29 = arith.constant 0 : index
    %c0_30 = arith.constant 0 : index
    %161 = vector.load %arg4[%c0_29, %c0_30] : memref<4x32xf32, #tpu.memory_space<vmem>>, vector<4x32xf32>
    tpu.vector_store %arg4[%c0_29, %c0_30], %160 {strides = array<i32>} : memref<4x32xf32, #tpu.memory_space<vmem>>, vector<4x32xf32>,
    return
  }
}

</mosaic_0001>

<llo_original>
// kernel: tpu_custom_call.1
$region0: #{tpu_custom_call.1}
  #allocation0 [shape = 'u32[]', space=smem, size = 0x4, offset = 0x4, fixed_abs, tag = 'smem constant byte address 0x4 - core index']
  #allocation1 [shape = 'u32[144,128]{1,0:T(1,128)}', space=vmem, size = 0x12000, scoped, tag = 'internal scratch']
  %s0 = inlined_call_operand.vmem [shape: f32[16,4], index: 0, kind: input, shape index: {}]
  %s1 = inlined_call_operand.vmem [shape: f32[4,32], index: 1, kind: input, shape index: {}]
  %s2 = inlined_call_operand.hbm [shape: f32[88,128], index: 2, kind: input, shape index: {}]
  %s3 = inlined_call_operand.hbm [shape: f32[16,128], index: 3, kind: output, shape index: {0}]
  %s4 = inlined_call_operand.hbm [shape: f32[4,32], index: 4, kind: output, shape index: {1}]
  %5 = xla_tuple %s3, %s4
  %s6 = sld [smem:[#allocation0]]
  $region34: #{tpu_custom_call.1} parent=0
    _
  %s8 = ssub.s32 1, %s6
  %s9 = scalar_select 0, %s8, %s6
  $region1: #{tpu_custom_call.1} parent=0
    #allocation2 [shape = 'u8[45056]{0}', space=vmem, size = 0xb000, scoped, tag = 'input window, operand 2, single buffered']
    #allocation3 [shape = 's32[1]{0}', space=sflag, size = 0x4, scoped, tag = 'scoped memory for tpu_custom_call.1']
    #allocation4 [shape = 's32[1]{0}', space=sflag, size = 0x4, scoped, tag = 'scoped memory for tpu_custom_call.1']
    #allocation5 [shape = 'u8[8192]{0}', space=vmem, size = 0x2000, scoped, tag = 'output window, operand 0, single buffered']
    #allocation6 [shape = 'u8[2048]{0}', space=vmem, size = 0x800, scoped, tag = 'output window, operand 1, single buffered']
    #allocation7 [shape = 's32[1]{0}', space=sflag, size = 0x4, scoped, tag = 'scoped memory for tpu_custom_call.1']
    %10 = vsyncpa [#allocation3], 0
    %11 = vsyncpa [#allocation4], 0
    %12 = vsyncpa [#allocation7], 0
    // Predicated region
    $region2: #{tpu_custom_call.1} parent=1 // pred_check
      _
    $region3: #{tpu_custom_call.1} parent=1 // pred_check_branch
      %14 = sbr.rel (0) target = $region5
    $region4: #{tpu_custom_call.1} parent=1 // pred_region
      _
    $region5: #{tpu_custom_call.1} parent=1 // pred_fallthru
      _
    // Predicated region
    $region6: #{tpu_custom_call.1} parent=1 // pred_check
      _
    $region7: #{tpu_custom_call.1} parent=1 // pred_check_branch
      %16 = sbr.rel (0) target = $region9
    $region8: #{tpu_custom_call.1} parent=1 // pred_region
      _
    $region9: #{tpu_custom_call.1} parent=1 // pred_fallthru
      _
    // Predicated region
    $region10: #{tpu_custom_call.1} parent=1 // pred_check
      _
    $region11: #{tpu_custom_call.1} parent=1 // pred_check_branch
      %18 = sbr.rel (0) target = $region13
    $region12: #{tpu_custom_call.1} parent=1 // pred_region
      %s20 = ssub.s32 1408, 1408
      %21 = vsyncadd [#allocation3], %s20
      %s22 = sshll.u32 [#allocation2], 4
      %s23 = int_to_ptr.vmem [resolvable:$true] %s22
      %28 = dma.hbm_to_vmem [thread:$0]  %s2, 1408, %s23, [#allocation3], 128, 128, 8
    $region13: #{tpu_custom_call.1} parent=1 // pred_fallthru
      _
    // Predicated region
    $region14: #{tpu_custom_call.1} parent=1 // pred_check
      _
    $region15: #{tpu_custom_call.1} parent=1 // pred_check_branch
      %30 = sbr.rel (0) target = $region17
    $region16: #{tpu_custom_call.1} parent=1 // pred_region
      %31 = dma.done [#allocation3], 1408
    $region17: #{tpu_custom_call.1} parent=1 // pred_fallthru
      _
    %v32 = vld [vmem:[#allocation2] sm:$0xf]
    %v33 = vld [vmem:[#allocation2 + $0x8] sm:$0xff]
    %v34 = vld [vmem:[#allocation2 + $0x10] sm:$0xff]
    %v35 = vld [vmem:[#allocation2 + $0x18] sm:$0xff]
    %v36 = vld [vmem:[#allocation2 + $0x20] sm:$0xff]
    %v37 = vld [vmem:[#allocation2 + $0x28] sm:$0x1]
    %v38 = vld [vmem:[#allocation2 + $0x30] sm:$0xff]
    %v39 = vld [vmem:[#allocation2 + $0x38] sm:$0xff]
    %v40 = vld [vmem:[#allocation2 + $0x40] sm:$0xff]
    %v41 = vld [vmem:[#allocation2 + $0x48] sm:$0xff]
    %v42 = vld [vmem:[#allocation2 + $0x50] sm:$0x1]
    %v43 = vld [vmem:[%s0] sm:$0xff]
    %v44 = vld [vmem:[%s0 + $0x8] sm:$0xff]
    %v45 = vlaneseq
    %v46 = vshrl.u32 %v45, 7
    %v47 = vsub.s32 0, %v46
    %v48 = vrot.slane %v37, %v47
    %vm49 = vcmask 31744
    %v51 = vsel %vm49, %v43, 0
    %v54 = vsel %vm49, %v44, 0
    %vm56 = vcmask 1043456
    %v58 = vsel %vm56, %v32, 0
    %60 = vmatprep.subr.mxu0 0.0
    %61 = vmatpush1.msra.mxu0 %v58
    %62 = vmatprep.subr.mxu0 0.0
    %63 = vmatpush1.msra.mxu0 0.0
    %64 = vmatprep.subr.mxu0 0.0
    %65 = vmatpush1.msra.mxu0 0.0
    %66 = vmatprep.subr.mxu0 0.0
    %67 = vmatpush1.msra.mxu0 0.0
    %68 = vmatprep.subr.mxu0 0.0
    %69 = vmatpush1.msra.mxu0 0.0
    %70 = vmatprep.subr.mxu0 0.0
    %71 = vmatpush1.msra.mxu0 0.0
    %72 = vmatprep.subr.mxu0 0.0
    %73 = vmatpush1.msra.mxu0 0.0
    %74 = vmatprep.subr.mxu0 0.0
    %75 = vmatpush1.msra.mxu0 0.0
    %76 = vmatprep.subr.mxu0 0.0
    %77 = vmatpush1.msra.mxu0 0.0
    %78 = vmatprep.subr.mxu0 0.0
    %79 = vmatpush1.msra.mxu0 0.0
    %80 = vmatprep.subr.mxu0 0.0
    %81 = vmatpush1.msra.mxu0 0.0
    %82 = vmatprep.subr.mxu0 0.0
    %83 = vmatpush1.msra.mxu0 0.0
    %84 = vmatprep.subr.mxu0 0.0
    %85 = vmatpush1.msra.mxu0 0.0
    %86 = vmatprep.subr.mxu0 0.0
    %87 = vmatpush1.msra.mxu0 0.0
    %88 = vmatprep.subr.mxu0 0.0
    %89 = vmatpush1.msra.mxu0 0.0
    %90 = vmatprep.subr.mxu0 0.0
    %91 = vmatpush1.msra.mxu0 0.0
    %92 = vmatprep.subr.mxu0 0.0
    %93 = vmatpush1.msra.mxu0 0.0
    %94 = vmatprep.subr.mxu0 0.0
    %95 = vmatpush1.msra.mxu0 0.0
    %96 = vmatprep.subr.mxu0 0.0
    %97 = vmatpush1.msra.mxu0 0.0
    %98 = vmatprep.subr.mxu0 0.0
    %99 = vmatpush1.msra.mxu0 0.0
    %100 = vmatprep.subr.mxu0 0.0
    %101 = vmatpush1.msra.mxu0 0.0
    %102 = vmatprep.subr.mxu0 0.0
    %103 = vmatpush1.msra.mxu0 0.0
    %104 = vmatprep.subr.mxu0 0.0
    %105 = vmatpush1.msra.mxu0 0.0
    %106 = vmatprep.subr.mxu0 0.0
    %107 = vmatpush1.msra.mxu0 0.0
    %108 = vmatprep.subr.mxu0 0.0
    %109 = vmatpush1.msra.mxu0 0.0
    %110 = vmatprep.subr.mxu0 0.0
    %111 = vmatpush1.msra.mxu0 0.0
    %112 = vmatprep.subr.mxu0 0.0
    %113 = vmatpush1.msra.mxu0 0.0
    %114 = vmatprep.subr.mxu0 0.0
    %115 = vmatpush1.msra.mxu0 0.0
    %116 = vmatprep.subr.mxu0 0.0
    %117 = vmatpush1.msra.mxu0 0.0
    %118 = vmatprep.subr.mxu0 0.0
    %119 = vmatpush1.msra.mxu0 0.0
    %120 = vmatprep.subr.mxu0 0.0
    %121 = vmatpush1.msra.mxu0 0.0
    %122 = vmatprep.subr.mxu0 0.0
    %123 = vmatpush1.msra.mxu0 0.0
    %124 = vmatprep.mubr.f32.mxu0 0.0
    %125 = vmatmul.mubr.f32.gmra.mrb[0].mxu0 %v51
    %v126 = vpop.f32.mrb[0].mxu0
    %v127 = vadd.f32 %v48, %v126
    %v128 = vpop.f32.mrb[0].mxu0
    %129 = vmatprep.mubr.f32.mxu0 0.0
    %130 = vmatmul.mubr.f32.gmra.mrb[0].mxu0 %v54
    %v131 = vpop.f32.mrb[0].mxu0
    %v132 = vadd.f32 %v48, %v131
    %v133 = vpop.f32.mrb[0].mxu0
    %134 = vdwg.mxu0
    %v135 = vld [vmem:[%s1] sm:$0x3]
    %v136 = vld [vmem:[%s1 + $0x2] sm:$0x3]
    %vm137 = vcmask 261120
    %v139 = vsel %vm137, %v135, 0
    %141 = vmatprep.subr.mxu0 0.0
    %142 = vmatpush1.msra.mxu0 %v33
    %143 = vmatprep.subr.mxu0 0.0
    %144 = vmatpush1.msra.mxu0 %v34
    %145 = vmatprep.subr.mxu0 0.0
    %146 = vmatpush1.msra.mxu0 %v35
    %147 = vmatprep.subr.mxu0 0.0
    %148 = vmatpush1.msra.mxu0 %v36
    %149 = vmatprep.subr.mxu0 0.0
    %150 = vmatpush1.msra.mxu0 0.0
    %151 = vmatprep.subr.mxu0 0.0
    %152 = vmatpush1.msra.mxu0 0.0
    %153 = vmatprep.subr.mxu0 0.0
    %154 = vmatpush1.msra.mxu0 0.0
    %155 = vmatprep.subr.mxu0 0.0
    %156 = vmatpush1.msra.mxu0 0.0
    %157 = vmatprep.subr.mxu0 0.0
    %158 = vmatpush1.msra.mxu0 0.0
    %159 = vmatprep.subr.mxu0 0.0
    %160 = vmatpush1.msra.mxu0 0.0
    %161 = vmatprep.subr.mxu0 0.0
    %162 = vmatpush1.msra.mxu0 0.0
    %163 = vmatprep.subr.mxu0 0.0
    %164 = vmatpush1.msra.mxu0 0.0
    %165 = vmatprep.subr.mxu0 0.0
    %166 = vmatpush1.msra.mxu0 0.0
    %167 = vmatprep.subr.mxu0 0.0
    %168 = vmatpush1.msra.mxu0 0.0
    %169 = vmatprep.subr.mxu0 0.0
    %170 = vmatpush1.msra.mxu0 0.0
    %171 = vmatprep.subr.mxu0 0.0
    %172 = vmatpush1.msra.mxu0 0.0
    %173 = vmatprep.subr.mxu0 0.0
    %174 = vmatpush1.msra.mxu0 0.0
    %175 = vmatprep.subr.mxu0 0.0
    %176 = vmatpush1.msra.mxu0 0.0
    %177 = vmatprep.subr.mxu0 0.0
    %178 = vmatpush1.msra.mxu0 0.0
    %179 = vmatprep.subr.mxu0 0.0
    %180 = vmatpush1.msra.mxu0 0.0
    %181 = vmatprep.subr.mxu0 0.0
    %182 = vmatpush1.msra.mxu0 0.0
    %183 = vmatprep.subr.mxu0 0.0
    %184 = vmatpush1.msra.mxu0 0.0
    %185 = vmatprep.subr.mxu0 0.0
    %186 = vmatpush1.msra.mxu0 0.0
    %187 = vmatprep.subr.mxu0 0.0
    %188 = vmatpush1.msra.mxu0 0.0
    %189 = vmatprep.subr.mxu0 0.0
    %190 = vmatpush1.msra.mxu0 0.0
    %191 = vmatprep.subr.mxu0 0.0
    %192 = vmatpush1.msra.mxu0 0.0
    %193 = vmatprep.subr.mxu0 0.0
    %194 = vmatpush1.msra.mxu0 0.0
    %195 = vmatprep.subr.mxu0 0.0
    %196 = vmatpush1.msra.mxu0 0.0
    %197 = vmatprep.subr.mxu0 0.0
    %198 = vmatpush1.msra.mxu0 0.0
    %199 = vmatprep.subr.mxu0 0.0
    %200 = vmatpush1.msra.mxu0 0.0
    %201 = vmatprep.subr.mxu0 0.0
    %202 = vmatpush1.msra.mxu0 0.0
    %203 = vmatprep.subr.mxu0 0.0
    %204 = vmatpush1.msra.mxu0 0.0
    %205 = vmatprep.mubr.f32.mxu0 0.0
    %206 = vmatmul.mubr.f32.gmra.mrb[0].mxu0 %v139
    %v207 = vpop.f32.mrb[0].mxu0
    %v208 = vadd.f32 0.0, %v207
    %v209 = vpop.f32.mrb[0].mxu0
    %210 = vdwg.mxu0
    %v211 = vadd.f32 %v127, %v208
    %v212 = vxor.u32 %v211, 2147483648
    %v213 = vmul.f32 %v212, 1.442695
    %v214 = vpow.pop %v213
    %v215 = vadd.f32 %v214, 1.0
    %v216 = vrcp.pop %v215
    %v217 = vmul.f32 1.0, %v216
    %v218 = vtanh.pop %v211
    %220 = vrot.lane.b32.xlu0 %v136, 32
    %v221 = vpop.permute.xlu0 %220
    %v223 = vmul.f32 %v217, %v221
    %225 = vrot.lane.b32.xlu0 %v218, 64
    %v226 = vpop.permute.xlu0 %225
    %v228 = vmul.f32 %v217, %v226
    %230 = vrot.lane.b32.xlu0 %v228, 32
    %v231 = vpop.permute.xlu0 %230
    %v233 = vadd.f32 %v223, %v231
    %v234 = vtanh.pop %v233
    %236 = vrot.lane.b32.xlu0 %v234, 64
    %v237 = vpop.permute.xlu0 %236
    %v239 = vmul.f32 %v217, %v237
    %241 = vrot.lane.b32.xlu0 %v239, 32
    %v242 = vpop.permute.xlu0 %241
    %v243 = vsel %vm137, %v242, 0
    %245 = vmatprep.subr.mxu0 0.0
    %246 = vmatpush1.msra.mxu0 %v33
    %247 = vmatprep.subr.mxu0 0.0
    %248 = vmatpush1.msra.mxu0 %v34
    %249 = vmatprep.subr.mxu0 0.0
    %250 = vmatpush1.msra.mxu0 %v35
    %251 = vmatprep.subr.mxu0 0.0
    %252 = vmatpush1.msra.mxu0 %v36
    %253 = vmatprep.subr.mxu0 0.0
    %254 = vmatpush1.msra.mxu0 0.0
    %255 = vmatprep.subr.mxu0 0.0
    %256 = vmatpush1.msra.mxu0 0.0
    %257 = vmatprep.subr.mxu0 0.0
    %258 = vmatpush1.msra.mxu0 0.0
    %259 = vmatprep.subr.mxu0 0.0
    %260 = vmatpush1.msra.mxu0 0.0
    %261 = vmatprep.subr.mxu0 0.0
    %262 = vmatpush1.msra.mxu0 0.0
    %263 = vmatprep.subr.mxu0 0.0
    %264 = vmatpush1.msra.mxu0 0.0
    %265 = vmatprep.subr.mxu0 0.0
    %266 = vmatpush1.msra.mxu0 0.0
    %267 = vmatprep.subr.mxu0 0.0
    %268 = vmatpush1.msra.mxu0 0.0
    %269 = vmatprep.subr.mxu0 0.0
    %270 = vmatpush1.msra.mxu0 0.0
    %271 = vmatprep.subr.mxu0 0.0
    %272 = vmatpush1.msra.mxu0 0.0
    %273 = vmatprep.subr.mxu0 0.0
    %274 = vmatpush1.msra.mxu0 0.0
    %275 = vmatprep.subr.mxu0 0.0
    %276 = vmatpush1.msra.mxu0 0.0
    %277 = vmatprep.subr.mxu0 0.0
    %278 = vmatpush1.msra.mxu0 0.0
    %279 = vmatprep.subr.mxu0 0.0
    %280 = vmatpush1.msra.mxu0 0.0
    %281 = vmatprep.subr.mxu0 0.0
    %282 = vmatpush1.msra.mxu0 0.0
    %283 = vmatprep.subr.mxu0 0.0
    %284 = vmatpush1.msra.mxu0 0.0
    %285 = vmatprep.subr.mxu0 0.0
    %286 = vmatpush1.msra.mxu0 0.0
    %287 = vmatprep.subr.mxu0 0.0
    %288 = vmatpush1.msra.mxu0 0.0
    %289 = vmatprep.subr.mxu0 0.0
    %290 = vmatpush1.msra.mxu0 0.0
    %291 = vmatprep.subr.mxu0 0.0
    %292 = vmatpush1.msra.mxu0 0.0
    %293 = vmatprep.subr.mxu0 0.0
    %294 = vmatpush1.msra.mxu0 0.0
    %295 = vmatprep.subr.mxu0 0.0
    %296 = vmatpush1.msra.mxu0 0.0
    %297 = vmatprep.subr.mxu0 0.0
    %298 = vmatpush1.msra.mxu0 0.0
    %299 = vmatprep.subr.mxu0 0.0
    %300 = vmatpush1.msra.mxu0 0.0
    %301 = vmatprep.subr.mxu0 0.0
    %302 = vmatpush1.msra.mxu0 0.0
    %303 = vmatprep.subr.mxu0 0.0
    %304 = vmatpush1.msra.mxu0 0.0
    %305 = vmatprep.subr.mxu0 0.0
    %306 = vmatpush1.msra.mxu0 0.0
    %307 = vmatprep.subr.mxu0 0.0
    %308 = vmatpush1.msra.mxu0 0.0
    %309 = vmatprep.mubr.f32.mxu0 0.0
    %310 = vmatmul.mubr.f32.gmra.mrb[0].mxu0 %v243
    %v311 = vpop.f32.mrb[0].mxu0
    %v312 = vadd.f32 0.0, %v311
    %v313 = vpop.f32.mrb[0].mxu0
    %314 = vdwg.mxu0
    %v316 = vrot.slane %v312, 6
    %v318 = vadd.f32 %v127, %v316
    %v319 = vxor.u32 %v318, 2147483648
    %v320 = vmul.f32 %v319, 1.442695
    %v321 = vpow.pop %v320
    %v322 = vadd.f32 %v321, 1.0
    %v323 = vrcp.pop %v322
    %v324 = vmul.f32 1.0, %v323
    %v325 = vtanh.pop %v318
    %v327 = vrot.slane %v233, 6
    %v329 = vmul.f32 %v324, %v327
    %331 = vrot.lane.b32.xlu0 %v325, 64
    %v332 = vpop.permute.xlu0 %331
    %v334 = vmul.f32 %v324, %v332
    %336 = vrot.lane.b32.xlu0 %v334, 32
    %v337 = vpop.permute.xlu0 %336
    %v339 = vadd.f32 %v329, %v337
    %v340 = vtanh.pop %v339
    %342 = vrot.lane.b32.xlu0 %v340, 64
    %v343 = vpop.permute.xlu0 %342
    %v345 = vmul.f32 %v324, %v343
    %v347 = vrot.slane %v345, 2
    %348 = vrot.lane.b32.xlu0 %v347, 32
    %v349 = vpop.permute.xlu0 %348
    %v350 = vsel %vm137, %v349, 0
    %352 = vmatprep.subr.mxu0 0.0
    %353 = vmatpush1.msra.mxu0 %v33
    %354 = vmatprep.subr.mxu0 0.0
    %355 = vmatpush1.msra.mxu0 %v34
    %356 = vmatprep.subr.mxu0 0.0
    %357 = vmatpush1.msra.mxu0 %v35
    %358 = vmatprep.subr.mxu0 0.0
    %359 = vmatpush1.msra.mxu0 %v36
    %360 = vmatprep.subr.mxu0 0.0
    %361 = vmatpush1.msra.mxu0 0.0
    %362 = vmatprep.subr.mxu0 0.0
    %363 = vmatpush1.msra.mxu0 0.0
    %364 = vmatprep.subr.mxu0 0.0
    %365 = vmatpush1.msra.mxu0 0.0
    %366 = vmatprep.subr.mxu0 0.0
    %367 = vmatpush1.msra.mxu0 0.0
    %368 = vmatprep.subr.mxu0 0.0
    %369 = vmatpush1.msra.mxu0 0.0
    %370 = vmatprep.subr.mxu0 0.0
    %371 = vmatpush1.msra.mxu0 0.0
    %372 = vmatprep.subr.mxu0 0.0
    %373 = vmatpush1.msra.mxu0 0.0
    %374 = vmatprep.subr.mxu0 0.0
    %375 = vmatpush1.msra.mxu0 0.0
    %376 = vmatprep.subr.mxu0 0.0
    %377 = vmatpush1.msra.mxu0 0.0
    %378 = vmatprep.subr.mxu0 0.0
    %379 = vmatpush1.msra.mxu0 0.0
    %380 = vmatprep.subr.mxu0 0.0
    %381 = vmatpush1.msra.mxu0 0.0
    %382 = vmatprep.subr.mxu0 0.0
    %383 = vmatpush1.msra.mxu0 0.0
    %384 = vmatprep.subr.mxu0 0.0
    %385 = vmatpush1.msra.mxu0 0.0
    %386 = vmatprep.subr.mxu0 0.0
    %387 = vmatpush1.msra.mxu0 0.0
    %388 = vmatprep.subr.mxu0 0.0
    %389 = vmatpush1.msra.mxu0 0.0
    %390 = vmatprep.subr.mxu0 0.0
    %391 = vmatpush1.msra.mxu0 0.0
    %392 = vmatprep.subr.mxu0 0.0
    %393 = vmatpush1.msra.mxu0 0.0
    %394 = vmatprep.subr.mxu0 0.0
    %395 = vmatpush1.msra.mxu0 0.0
    %396 = vmatprep.subr.mxu0 0.0
    %397 = vmatpush1.msra.mxu0 0.0
    %398 = vmatprep.subr.mxu0 0.0
    %399 = vmatpush1.msra.mxu0 0.0
    %400 = vmatprep.subr.mxu0 0.0
    %401 = vmatpush1.msra.mxu0 0.0
    %402 = vmatprep.subr.mxu0 0.0
    %403 = vmatpush1.msra.mxu0 0.0
    %404 = vmatprep.subr.mxu0 0.0
    %405 = vmatpush1.msra.mxu0 0.0
    %406 = vmatprep.subr.mxu0 0.0
    %407 = vmatpush1.msra.mxu0 0.0
    %408 = vmatprep.subr.mxu0 0.0
    %409 = vmatpush1.msra.mxu0 0.0
    %410 = vmatprep.subr.mxu0 0.0
    %411 = vmatpush1.msra.mxu0 0.0
    %412 = vmatprep.subr.mxu0 0.0
    %413 = vmatpush1.msra.mxu0 0.0
    %414 = vmatprep.subr.mxu0 0.0
    %415 = vmatpush1.msra.mxu0 0.0
    %416 = vmatprep.mubr.f32.mxu0 0.0
    %417 = vmatmul.mubr.f32.gmra.mrb[0].mxu0 %v350
    %v418 = vpop.f32.mrb[0].mxu0
    %v419 = vadd.f32 0.0, %v418
    %v420 = vpop.f32.mrb[0].mxu0
    %421 = vdwg.mxu0
    %v423 = vrot.slane %v419, 4
    %v425 = vadd.f32 %v127, %v423
    %v426 = vxor.u32 %v425, 2147483648
    %v427 = vmul.f32 %v426, 1.442695
    %v428 = vpow.pop %v427
    %v429 = vadd.f32 %v428, 1.0
    %v430 = vrcp.pop %v429
    %v431 = vmul.f32 1.0, %v430
    %v432 = vtanh.pop %v425
    %v434 = vrot.slane %v339, 6
    %v436 = vmul.f32 %v431, %v434
    %438 = vrot.lane.b32.xlu0 %v432, 64
    %v439 = vpop.permute.xlu0 %438
    %v441 = vmul.f32 %v431, %v439
    %443 = vrot.lane.b32.xlu0 %v441, 32
    %v444 = vpop.permute.xlu0 %443
    %v446 = vadd.f32 %v436, %v444
    %v447 = vtanh.pop %v446
    %449 = vrot.lane.b32.xlu0 %v447, 64
    %v450 = vpop.permute.xlu0 %449
    %v452 = vmul.f32 %v431, %v450
    %v454 = vrot.slane %v452, 4
    %455 = vrot.lane.b32.xlu0 %v454, 32
    %v456 = vpop.permute.xlu0 %455
    %v457 = vsel %vm137, %v456, 0
    %459 = vmatprep.subr.mxu0 0.0
    %460 = vmatpush1.msra.mxu0 %v33
    %461 = vmatprep.subr.mxu0 0.0
    %462 = vmatpush1.msra.mxu0 %v34
    %463 = vmatprep.subr.mxu0 0.0
    %464 = vmatpush1.msra.mxu0 %v35
    %465 = vmatprep.subr.mxu0 0.0
    %466 = vmatpush1.msra.mxu0 %v36
    %467 = vmatprep.subr.mxu0 0.0
    %468 = vmatpush1.msra.mxu0 0.0
    %469 = vmatprep.subr.mxu0 0.0
    %470 = vmatpush1.msra.mxu0 0.0
    %471 = vmatprep.subr.mxu0 0.0
    %472 = vmatpush1.msra.mxu0 0.0
    %473 = vmatprep.subr.mxu0 0.0
    %474 = vmatpush1.msra.mxu0 0.0
    %475 = vmatprep.subr.mxu0 0.0
    %476 = vmatpush1.msra.mxu0 0.0
    %477 = vmatprep.subr.mxu0 0.0
    %478 = vmatpush1.msra.mxu0 0.0
    %479 = vmatprep.subr.mxu0 0.0
    %480 = vmatpush1.msra.mxu0 0.0
    %481 = vmatprep.subr.mxu0 0.0
    %482 = vmatpush1.msra.mxu0 0.0
    %483 = vmatprep.subr.mxu0 0.0
    %484 = vmatpush1.msra.mxu0 0.0
    %485 = vmatprep.subr.mxu0 0.0
    %486 = vmatpush1.msra.mxu0 0.0
    %487 = vmatprep.subr.mxu0 0.0
    %488 = vmatpush1.msra.mxu0 0.0
    %489 = vmatprep.subr.mxu0 0.0
    %490 = vmatpush1.msra.mxu0 0.0
    %491 = vmatprep.subr.mxu0 0.0
    %492 = vmatpush1.msra.mxu0 0.0
    %493 = vmatprep.subr.mxu0 0.0
    %494 = vmatpush1.msra.mxu0 0.0
    %495 = vmatprep.subr.mxu0 0.0
    %496 = vmatpush1.msra.mxu0 0.0
    %497 = vmatprep.subr.mxu0 0.0
    %498 = vmatpush1.msra.mxu0 0.0
    %499 = vmatprep.subr.mxu0 0.0
    %500 = vmatpush1.msra.mxu0 0.0
    %501 = vmatprep.subr.mxu0 0.0
    %502 = vmatpush1.msra.mxu0 0.0
    %503 = vmatprep.subr.mxu0 0.0
    %504 = vmatpush1.msra.mxu0 0.0
    %505 = vmatprep.subr.mxu0 0.0
    %506 = vmatpush1.msra.mxu0 0.0
    %507 = vmatprep.subr.mxu0 0.0
    %508 = vmatpush1.msra.mxu0 0.0
    %509 = vmatprep.subr.mxu0 0.0
    %510 = vmatpush1.msra.mxu0 0.0
    %511 = vmatprep.subr.mxu0 0.0
    %512 = vmatpush1.msra.mxu0 0.0
    %513 = vmatprep.subr.mxu0 0.0
    %514 = vmatpush1.msra.mxu0 0.0
    %515 = vmatprep.subr.mxu0 0.0
    %516 = vmatpush1.msra.mxu0 0.0
    %517 = vmatprep.subr.mxu0 0.0
    %518 = vmatpush1.msra.mxu0 0.0
    %519 = vmatprep.subr.mxu0 0.0
    %520 = vmatpush1.msra.mxu0 0.0
    %521 = vmatprep.subr.mxu0 0.0
    %522 = vmatpush1.msra.mxu0 0.0
    %523 = vmatprep.mubr.f32.mxu0 0.0
    %524 = vmatmul.mubr.f32.gmra.mrb[0].mxu0 %v457
    %v525 = vpop.f32.mrb[0].mxu0
    %v526 = vadd.f32 0.0, %v525
    %v527 = vpop.f32.mrb[0].mxu0
    %528 = vdwg.mxu0
    %v530 = vrot.slane %v526, 2
    %v532 = vadd.f32 %v127, %v530
    %v533 = vxor.u32 %v532, 2147483648
    %v534 = vmul.f32 %v533, 1.442695
    %v535 = vpow.pop %v534
    %v536 = vadd.f32 %v535, 1.0
    %v537 = vrcp.pop %v536
    %v538 = vmul.f32 1.0, %v537
    %v539 = vtanh.pop %v532
    %v541 = vrot.slane %v446, 6
    %v543 = vmul.f32 %v538, %v541
    %545 = vrot.lane.b32.xlu0 %v539, 64
    %v546 = vpop.permute.xlu0 %545
    %v548 = vmul.f32 %v538, %v546
    %550 = vrot.lane.b32.xlu0 %v548, 32
    %v551 = vpop.permute.xlu0 %550
    %v553 = vadd.f32 %v543, %v551
    %v554 = vtanh.pop %v553
    %556 = vrot.lane.b32.xlu0 %v554, 64
    %v557 = vpop.permute.xlu0 %556
    %v559 = vmul.f32 %v538, %v557
    %v561 = vrot.slane %v559, 6
    %562 = vrot.lane.b32.xlu0 %v561, 32
    %v563 = vpop.permute.xlu0 %562
    %v564 = vsel %vm137, %v563, 0
    %566 = vmatprep.subr.mxu0 0.0
    %567 = vmatpush1.msra.mxu0 %v33
    %568 = vmatprep.subr.mxu0 0.0
    %569 = vmatpush1.msra.mxu0 %v34
    %570 = vmatprep.subr.mxu0 0.0
    %571 = vmatpush1.msra.mxu0 %v35
    %572 = vmatprep.subr.mxu0 0.0
    %573 = vmatpush1.msra.mxu0 %v36
    %574 = vmatprep.subr.mxu0 0.0
    %575 = vmatpush1.msra.mxu0 0.0
    %576 = vmatprep.subr.mxu0 0.0
    %577 = vmatpush1.msra.mxu0 0.0
    %578 = vmatprep.subr.mxu0 0.0
    %579 = vmatpush1.msra.mxu0 0.0
    %580 = vmatprep.subr.mxu0 0.0
    %581 = vmatpush1.msra.mxu0 0.0
    %582 = vmatprep.subr.mxu0 0.0
    %583 = vmatpush1.msra.mxu0 0.0
    %584 = vmatprep.subr.mxu0 0.0
    %585 = vmatpush1.msra.mxu0 0.0
    %586 = vmatprep.subr.mxu0 0.0
    %587 = vmatpush1.msra.mxu0 0.0
    %588 = vmatprep.subr.mxu0 0.0
    %589 = vmatpush1.msra.mxu0 0.0
    %590 = vmatprep.subr.mxu0 0.0
    %591 = vmatpush1.msra.mxu0 0.0
    %592 = vmatprep.subr.mxu0 0.0
    %593 = vmatpush1.msra.mxu0 0.0
    %594 = vmatprep.subr.mxu0 0.0
    %595 = vmatpush1.msra.mxu0 0.0
    %596 = vmatprep.subr.mxu0 0.0
    %597 = vmatpush1.msra.mxu0 0.0
    %598 = vmatprep.subr.mxu0 0.0
    %599 = vmatpush1.msra.mxu0 0.0
    %600 = vmatprep.subr.mxu0 0.0
    %601 = vmatpush1.msra.mxu0 0.0
    %602 = vmatprep.subr.mxu0 0.0
    %603 = vmatpush1.msra.mxu0 0.0
    %604 = vmatprep.subr.mxu0 0.0
    %605 = vmatpush1.msra.mxu0 0.0
    %606 = vmatprep.subr.mxu0 0.0
    %607 = vmatpush1.msra.mxu0 0.0
    %608 = vmatprep.subr.mxu0 0.0
    %609 = vmatpush1.msra.mxu0 0.0
    %610 = vmatprep.subr.mxu0 0.0
    %611 = vmatpush1.msra.mxu0 0.0
    %612 = vmatprep.subr.mxu0 0.0
    %613 = vmatpush1.msra.mxu0 0.0
    %614 = vmatprep.subr.mxu0 0.0
    %615 = vmatpush1.msra.mxu0 0.0
    %616 = vmatprep.subr.mxu0 0.0
    %617 = vmatpush1.msra.mxu0 0.0
    %618 = vmatprep.subr.mxu0 0.0
    %619 = vmatpush1.msra.mxu0 0.0
    %620 = vmatprep.subr.mxu0 0.0
    %621 = vmatpush1.msra.mxu0 0.0
    %622 = vmatprep.subr.mxu0 0.0
    %623 = vmatpush1.msra.mxu0 0.0
    %624 = vmatprep.subr.mxu0 0.0
    %625 = vmatpush1.msra.mxu0 0.0
    %626 = vmatprep.subr.mxu0 0.0
    %627 = vmatpush1.msra.mxu0 0.0
    %628 = vmatprep.subr.mxu0 0.0
    %629 = vmatpush1.msra.mxu0 0.0
    %630 = vmatprep.mubr.f32.mxu0 0.0
    %631 = vmatmul.mubr.f32.gmra.mrb[0].mxu0 %v564
    %v632 = vpop.f32.mrb[0].mxu0
    %v633 = vadd.f32 0.0, %v632
    %v634 = vpop.f32.mrb[0].mxu0
    %635 = vdwg.mxu0
    %v636 = vadd.f32 %v132, %v633
    %v637 = vxor.u32 %v636, 2147483648
    %v638 = vmul.f32 %v637, 1.442695
    %v639 = vpow.pop %v638
    %v640 = vadd.f32 %v639, 1.0
    %v641 = vrcp.pop %v640
    %v642 = vmul.f32 1.0, %v641
    %v643 = vtanh.pop %v636
    %v645 = vrot.slane %v553, 6
    %v647 = vmul.f32 %v642, %v645
    %649 = vrot.lane.b32.xlu0 %v643, 64
    %v650 = vpop.permute.xlu0 %649
    %v652 = vmul.f32 %v642, %v650
    %654 = vrot.lane.b32.xlu0 %v652, 32
    %v655 = vpop.permute.xlu0 %654
    %v657 = vadd.f32 %v647, %v655
    %v658 = vtanh.pop %v657
    %660 = vrot.lane.b32.xlu0 %v658, 64
    %v661 = vpop.permute.xlu0 %660
    %v663 = vmul.f32 %v642, %v661
    %665 = vrot.lane.b32.xlu0 %v663, 32
    %v666 = vpop.permute.xlu0 %665
    %v667 = vsel %vm137, %v666, 0
    %669 = vmatprep.subr.mxu0 0.0
    %670 = vmatpush1.msra.mxu0 %v33
    %671 = vmatprep.subr.mxu0 0.0
    %672 = vmatpush1.msra.mxu0 %v34
    %673 = vmatprep.subr.mxu0 0.0
    %674 = vmatpush1.msra.mxu0 %v35
    %675 = vmatprep.subr.mxu0 0.0
    %676 = vmatpush1.msra.mxu0 %v36
    %677 = vmatprep.subr.mxu0 0.0
    %678 = vmatpush1.msra.mxu0 0.0
    %679 = vmatprep.subr.mxu0 0.0
    %680 = vmatpush1.msra.mxu0 0.0
    %681 = vmatprep.subr.mxu0 0.0
    %682 = vmatpush1.msra.mxu0 0.0
    %683 = vmatprep.subr.mxu0 0.0
    %684 = vmatpush1.msra.mxu0 0.0
    %685 = vmatprep.subr.mxu0 0.0
    %686 = vmatpush1.msra.mxu0 0.0
    %687 = vmatprep.subr.mxu0 0.0
    %688 = vmatpush1.msra.mxu0 0.0
    %689 = vmatprep.subr.mxu0 0.0
    %690 = vmatpush1.msra.mxu0 0.0
    %691 = vmatprep.subr.mxu0 0.0
    %692 = vmatpush1.msra.mxu0 0.0
    %693 = vmatprep.subr.mxu0 0.0
    %694 = vmatpush1.msra.mxu0 0.0
    %695 = vmatprep.subr.mxu0 0.0
    %696 = vmatpush1.msra.mxu0 0.0
    %697 = vmatprep.subr.mxu0 0.0
    %698 = vmatpush1.msra.mxu0 0.0
    %699 = vmatprep.subr.mxu0 0.0
    %700 = vmatpush1.msra.mxu0 0.0
    %701 = vmatprep.subr.mxu0 0.0
    %702 = vmatpush1.msra.mxu0 0.0
    %703 = vmatprep.subr.mxu0 0.0
    %704 = vmatpush1.msra.mxu0 0.0
    %705 = vmatprep.subr.mxu0 0.0
    %706 = vmatpush1.msra.mxu0 0.0
    %707 = vmatprep.subr.mxu0 0.0
    %708 = vmatpush1.msra.mxu0 0.0
    %709 = vmatprep.subr.mxu0 0.0
    %710 = vmatpush1.msra.mxu0 0.0
    %711 = vmatprep.subr.mxu0 0.0
    %712 = vmatpush1.msra.mxu0 0.0
    %713 = vmatprep.subr.mxu0 0.0
    %714 = vmatpush1.msra.mxu0 0.0
    %715 = vmatprep.subr.mxu0 0.0
    %716 = vmatpush1.msra.mxu0 0.0
    %717 = vmatprep.subr.mxu0 0.0
    %718 = vmatpush1.msra.mxu0 0.0
    %719 = vmatprep.subr.mxu0 0.0
    %720 = vmatpush1.msra.mxu0 0.0
    %721 = vmatprep.subr.mxu0 0.0
    %722 = vmatpush1.msra.mxu0 0.0
    %723 = vmatprep.subr.mxu0 0.0
    %724 = vmatpush1.msra.mxu0 0.0
    %725 = vmatprep.subr.mxu0 0.0
    %726 = vmatpush1.msra.mxu0 0.0
    %727 = vmatprep.subr.mxu0 0.0
    %728 = vmatpush1.msra.mxu0 0.0
    %729 = vmatprep.subr.mxu0 0.0
    %730 = vmatpush1.msra.mxu0 0.0
    %731 = vmatprep.subr.mxu0 0.0
    %732 = vmatpush1.msra.mxu0 0.0
    %733 = vmatprep.mubr.f32.mxu0 0.0
    %734 = vmatmul.mubr.f32.gmra.mrb[0].mxu0 %v667
    %v735 = vpop.f32.mrb[0].mxu0
    %v736 = vadd.f32 0.0, %v735
    %v737 = vpop.f32.mrb[0].mxu0
    %738 = vdwg.mxu0
    %v740 = vrot.slane %v736, 6
    %v742 = vadd.f32 %v132, %v740
    %v743 = vxor.u32 %v742, 2147483648
    %v744 = vmul.f32 %v743, 1.442695
    %v745 = vpow.pop %v744
    %v746 = vadd.f32 %v745, 1.0
    %v747 = vrcp.pop %v746
    %v748 = vmul.f32 1.0, %v747
    %v749 = vtanh.pop %v742
    %v751 = vrot.slane %v657, 6
    %v753 = vmul.f32 %v748, %v751
    %755 = vrot.lane.b32.xlu0 %v749, 64
    %v756 = vpop.permute.xlu0 %755
    %v758 = vmul.f32 %v748, %v756
    %760 = vrot.lane.b32.xlu0 %v758, 32
    %v761 = vpop.permute.xlu0 %760
    %v763 = vadd.f32 %v753, %v761
    %v764 = vtanh.pop %v763
    %766 = vrot.lane.b32.xlu0 %v764, 64
    %v767 = vpop.permute.xlu0 %766
    %v769 = vmul.f32 %v748, %v767
    %v771 = vrot.slane %v769, 2
    %772 = vrot.lane.b32.xlu0 %v771, 32
    %v773 = vpop.permute.xlu0 %772
    %v774 = vsel %vm137, %v773, 0
    %776 = vmatprep.subr.mxu0 0.0
    %777 = vmatpush1.msra.mxu0 %v33
    %778 = vmatprep.subr.mxu0 0.0
    %779 = vmatpush1.msra.mxu0 %v34
    %780 = vmatprep.subr.mxu0 0.0
    %781 = vmatpush1.msra.mxu0 %v35
    %782 = vmatprep.subr.mxu0 0.0
    %783 = vmatpush1.msra.mxu0 %v36
    %784 = vmatprep.subr.mxu0 0.0
    %785 = vmatpush1.msra.mxu0 0.0
    %786 = vmatprep.subr.mxu0 0.0
    %787 = vmatpush1.msra.mxu0 0.0
    %788 = vmatprep.subr.mxu0 0.0
    %789 = vmatpush1.msra.mxu0 0.0
    %790 = vmatprep.subr.mxu0 0.0
    %791 = vmatpush1.msra.mxu0 0.0
    %792 = vmatprep.subr.mxu0 0.0
    %793 = vmatpush1.msra.mxu0 0.0
    %794 = vmatprep.subr.mxu0 0.0
    %795 = vmatpush1.msra.mxu0 0.0
    %796 = vmatprep.subr.mxu0 0.0
    %797 = vmatpush1.msra.mxu0 0.0
    %798 = vmatprep.subr.mxu0 0.0
    %799 = vmatpush1.msra.mxu0 0.0
    %800 = vmatprep.subr.mxu0 0.0
    %801 = vmatpush1.msra.mxu0 0.0
    %802 = vmatprep.subr.mxu0 0.0
    %803 = vmatpush1.msra.mxu0 0.0
    %804 = vmatprep.subr.mxu0 0.0
    %805 = vmatpush1.msra.mxu0 0.0
    %806 = vmatprep.subr.mxu0 0.0
    %807 = vmatpush1.msra.mxu0 0.0
    %808 = vmatprep.subr.mxu0 0.0
    %809 = vmatpush1.msra.mxu0 0.0
    %810 = vmatprep.subr.mxu0 0.0
    %811 = vmatpush1.msra.mxu0 0.0
    %812 = vmatprep.subr.mxu0 0.0
    %813 = vmatpush1.msra.mxu0 0.0
    %814 = vmatprep.subr.mxu0 0.0
    %815 = vmatpush1.msra.mxu0 0.0
    %816 = vmatprep.subr.mxu0 0.0
    %817 = vmatpush1.msra.mxu0 0.0
    %818 = vmatprep.subr.mxu0 0.0
    %819 = vmatpush1.msra.mxu0 0.0
    %820 = vmatprep.subr.mxu0 0.0
    %821 = vmatpush1.msra.mxu0 0.0
    %822 = vmatprep.subr.mxu0 0.0
    %823 = vmatpush1.msra.mxu0 0.0
    %824 = vmatprep.subr.mxu0 0.0
    %825 = vmatpush1.msra.mxu0 0.0
    %826 = vmatprep.subr.mxu0 0.0
    %827 = vmatpush1.msra.mxu0 0.0
    %828 = vmatprep.subr.mxu0 0.0
    %829 = vmatpush1.msra.mxu0 0.0
    %830 = vmatprep.subr.mxu0 0.0
    %831 = vmatpush1.msra.mxu0 0.0
    %832 = vmatprep.subr.mxu0 0.0
    %833 = vmatpush1.msra.mxu0 0.0
    %834 = vmatprep.subr.mxu0 0.0
    %835 = vmatpush1.msra.mxu0 0.0
    %836 = vmatprep.subr.mxu0 0.0
    %837 = vmatpush1.msra.mxu0 0.0
    %838 = vmatprep.subr.mxu0 0.0
    %839 = vmatpush1.msra.mxu0 0.0
    %840 = vmatprep.mubr.f32.mxu0 0.0
    %841 = vmatmul.mubr.f32.gmra.mrb[0].mxu0 %v774
    %v842 = vpop.f32.mrb[0].mxu0
    %v843 = vadd.f32 0.0, %v842
    %v844 = vpop.f32.mrb[0].mxu0
    %845 = vdwg.mxu0
    %v847 = vrot.slane %v843, 4
    %v849 = vadd.f32 %v132, %v847
    %v850 = vxor.u32 %v849, 2147483648
    %v851 = vmul.f32 %v850, 1.442695
    %v852 = vpow.pop %v851
    %v853 = vadd.f32 %v852, 1.0
    %v854 = vrcp.pop %v853
    %v855 = vmul.f32 1.0, %v854
    %v856 = vtanh.pop %v849
    %v858 = vrot.slane %v763, 6
    %v860 = vmul.f32 %v855, %v858
    %862 = vrot.lane.b32.xlu0 %v856, 64
    %v863 = vpop.permute.xlu0 %862
    %v865 = vmul.f32 %v855, %v863
    %867 = vrot.lane.b32.xlu0 %v865, 32
    %v868 = vpop.permute.xlu0 %867
    %v870 = vadd.f32 %v860, %v868
    %v871 = vtanh.pop %v870
    %873 = vrot.lane.b32.xlu0 %v871, 64
    %v874 = vpop.permute.xlu0 %873
    %v876 = vmul.f32 %v855, %v874
    %v878 = vrot.slane %v876, 4
    %879 = vrot.lane.b32.xlu0 %v878, 32
    %v880 = vpop.permute.xlu0 %879
    %v881 = vsel %vm137, %v880, 0
    %883 = vmatprep.subr.mxu0 0.0
    %884 = vmatpush1.msra.mxu0 %v33
    %885 = vmatprep.subr.mxu0 0.0
    %886 = vmatpush1.msra.mxu0 %v34
    %887 = vmatprep.subr.mxu0 0.0
    %888 = vmatpush1.msra.mxu0 %v35
    %889 = vmatprep.subr.mxu0 0.0
    %890 = vmatpush1.msra.mxu0 %v36
    %891 = vmatprep.subr.mxu0 0.0
    %892 = vmatpush1.msra.mxu0 0.0
    %893 = vmatprep.subr.mxu0 0.0
    %894 = vmatpush1.msra.mxu0 0.0
    %895 = vmatprep.subr.mxu0 0.0
    %896 = vmatpush1.msra.mxu0 0.0
    %897 = vmatprep.subr.mxu0 0.0
    %898 = vmatpush1.msra.mxu0 0.0
    %899 = vmatprep.subr.mxu0 0.0
    %900 = vmatpush1.msra.mxu0 0.0
    %901 = vmatprep.subr.mxu0 0.0
    %902 = vmatpush1.msra.mxu0 0.0
    %903 = vmatprep.subr.mxu0 0.0
    %904 = vmatpush1.msra.mxu0 0.0
    %905 = vmatprep.subr.mxu0 0.0
    %906 = vmatpush1.msra.mxu0 0.0
    %907 = vmatprep.subr.mxu0 0.0
    %908 = vmatpush1.msra.mxu0 0.0
    %909 = vmatprep.subr.mxu0 0.0
    %910 = vmatpush1.msra.mxu0 0.0
    %911 = vmatprep.subr.mxu0 0.0
    %912 = vmatpush1.msra.mxu0 0.0
    %913 = vmatprep.subr.mxu0 0.0
    %914 = vmatpush1.msra.mxu0 0.0
    %915 = vmatprep.subr.mxu0 0.0
    %916 = vmatpush1.msra.mxu0 0.0
    %917 = vmatprep.subr.mxu0 0.0
    %918 = vmatpush1.msra.mxu0 0.0
    %919 = vmatprep.subr.mxu0 0.0
    %920 = vmatpush1.msra.mxu0 0.0
    %921 = vmatprep.subr.mxu0 0.0
    %922 = vmatpush1.msra.mxu0 0.0
    %923 = vmatprep.subr.mxu0 0.0
    %924 = vmatpush1.msra.mxu0 0.0
    %925 = vmatprep.subr.mxu0 0.0
    %926 = vmatpush1.msra.mxu0 0.0
    %927 = vmatprep.subr.mxu0 0.0
    %928 = vmatpush1.msra.mxu0 0.0
    %929 = vmatprep.subr.mxu0 0.0
    %930 = vmatpush1.msra.mxu0 0.0
    %931 = vmatprep.subr.mxu0 0.0
    %932 = vmatpush1.msra.mxu0 0.0
    %933 = vmatprep.subr.mxu0 0.0
    %934 = vmatpush1.msra.mxu0 0.0
    %935 = vmatprep.subr.mxu0 0.0
    %936 = vmatpush1.msra.mxu0 0.0
    %937 = vmatprep.subr.mxu0 0.0
    %938 = vmatpush1.msra.mxu0 0.0
    %939 = vmatprep.subr.mxu0 0.0
    %940 = vmatpush1.msra.mxu0 0.0
    %941 = vmatprep.subr.mxu0 0.0
    %942 = vmatpush1.msra.mxu0 0.0
    %943 = vmatprep.subr.mxu0 0.0
    %944 = vmatpush1.msra.mxu0 0.0
    %945 = vmatprep.subr.mxu0 0.0
    %946 = vmatpush1.msra.mxu0 0.0
    %947 = vmatprep.mubr.f32.mxu0 0.0
    %948 = vmatmul.mubr.f32.gmra.mrb[0].mxu0 %v881
    %v949 = vpop.f32.mrb[0].mxu0
    %v950 = vadd.f32 0.0, %v949
    %v951 = vpop.f32.mrb[0].mxu0
    %952 = vdwg.mxu0
    %v954 = vrot.slane %v950, 2
    %v956 = vadd.f32 %v132, %v954
    %v957 = vxor.u32 %v956, 2147483648
    %v958 = vmul.f32 %v957, 1.442695
    %v959 = vpow.pop %v958
    %v960 = vadd.f32 %v959, 1.0
    %v961 = vrcp.pop %v960
    %v962 = vmul.f32 1.0, %v961
    %v963 = vtanh.pop %v956
    %v965 = vrot.slane %v870, 6
    %v967 = vmul.f32 %v962, %v965
    %969 = vrot.lane.b32.xlu0 %v963, 64
    %v970 = vpop.permute.xlu0 %969
    %v972 = vmul.f32 %v962, %v970
    %974 = vrot.lane.b32.xlu0 %v972, 32
    %v975 = vpop.permute.xlu0 %974
    %v977 = vadd.f32 %v967, %v975
    %v978 = vtanh.pop %v977
    %980 = vrot.lane.b32.xlu0 %v978, 64
    %v981 = vpop.permute.xlu0 %980
    %v983 = vmul.f32 %v962, %v981
    %vm984 = vcmask 1041408
    %v985 = vsel %vm984, %v239, %v345
    %v986 = vsel %vm56, %v985, %v452
    %vm987 = vcmask 1045504
    %v988 = vsel %vm987, %v986, %v559
    %v989 = vsel %vm984, %v663, %v769
    %v990 = vsel %vm56, %v989, %v876
    %v991 = vsel %vm987, %v990, %v983
    %v992 = vlaneseq
    %v993 = vshrl.u32 %v992, 7
    %v994 = vsub.s32 0, %v993
    %v995 = vrot.slane %v42, %v994
    %998 = vrot.lane.b32.xlu0 %v988, 32
    %v999 = vpop.permute.xlu0 %998
    %1000 = vrot.lane.b32.xlu0 %v991, 32
    %v1001 = vpop.permute.xlu0 %1000
    %v1002 = vsel %vm137, %v999, 0
    %v1004 = vsel %vm137, %v1001, 0
    %1006 = vmatprep.subr.mxu0 0.0
    %1007 = vmatpush1.msra.mxu0 %v38
    %1008 = vmatprep.subr.mxu0 0.0
    %1009 = vmatpush1.msra.mxu0 %v39
    %1010 = vmatprep.subr.mxu0 0.0
    %1011 = vmatpush1.msra.mxu0 %v40
    %1012 = vmatprep.subr.mxu0 0.0
    %1013 = vmatpush1.msra.mxu0 %v41
    %1014 = vmatprep.subr.mxu0 0.0
    %1015 = vmatpush1.msra.mxu0 0.0
    %1016 = vmatprep.subr.mxu0 0.0
    %1017 = vmatpush1.msra.mxu0 0.0
    %1018 = vmatprep.subr.mxu0 0.0
    %1019 = vmatpush1.msra.mxu0 0.0
    %1020 = vmatprep.subr.mxu0 0.0
    %1021 = vmatpush1.msra.mxu0 0.0
    %1022 = vmatprep.subr.mxu0 0.0
    %1023 = vmatpush1.msra.mxu0 0.0
    %1024 = vmatprep.subr.mxu0 0.0
    %1025 = vmatpush1.msra.mxu0 0.0
    %1026 = vmatprep.subr.mxu0 0.0
    %1027 = vmatpush1.msra.mxu0 0.0
    %1028 = vmatprep.subr.mxu0 0.0
    %1029 = vmatpush1.msra.mxu0 0.0
    %1030 = vmatprep.subr.mxu0 0.0
    %1031 = vmatpush1.msra.mxu0 0.0
    %1032 = vmatprep.subr.mxu0 0.0
    %1033 = vmatpush1.msra.mxu0 0.0
    %1034 = vmatprep.subr.mxu0 0.0
    %1035 = vmatpush1.msra.mxu0 0.0
    %1036 = vmatprep.subr.mxu0 0.0
    %1037 = vmatpush1.msra.mxu0 0.0
    %1038 = vmatprep.subr.mxu0 0.0
    %1039 = vmatpush1.msra.mxu0 0.0
    %1040 = vmatprep.subr.mxu0 0.0
    %1041 = vmatpush1.msra.mxu0 0.0
    %1042 = vmatprep.subr.mxu0 0.0
    %1043 = vmatpush1.msra.mxu0 0.0
    %1044 = vmatprep.subr.mxu0 0.0
    %1045 = vmatpush1.msra.mxu0 0.0
    %1046 = vmatprep.subr.mxu0 0.0
    %1047 = vmatpush1.msra.mxu0 0.0
    %1048 = vmatprep.subr.mxu0 0.0
    %1049 = vmatpush1.msra.mxu0 0.0
    %1050 = vmatprep.subr.mxu0 0.0
    %1051 = vmatpush1.msra.mxu0 0.0
    %1052 = vmatprep.subr.mxu0 0.0
    %1053 = vmatpush1.msra.mxu0 0.0
    %1054 = vmatprep.subr.mxu0 0.0
    %1055 = vmatpush1.msra.mxu0 0.0
    %1056 = vmatprep.subr.mxu0 0.0
    %1057 = vmatpush1.msra.mxu0 0.0
    %1058 = vmatprep.subr.mxu0 0.0
    %1059 = vmatpush1.msra.mxu0 0.0
    %1060 = vmatprep.subr.mxu0 0.0
    %1061 = vmatpush1.msra.mxu0 0.0
    %1062 = vmatprep.subr.mxu0 0.0
    %1063 = vmatpush1.msra.mxu0 0.0
    %1064 = vmatprep.subr.mxu0 0.0
    %1065 = vmatpush1.msra.mxu0 0.0
    %1066 = vmatprep.subr.mxu0 0.0
    %1067 = vmatpush1.msra.mxu0 0.0
    %1068 = vmatprep.subr.mxu0 0.0
    %1069 = vmatpush1.msra.mxu0 0.0
    %1070 = vmatprep.mubr.f32.mxu0 0.0
    %1071 = vmatmul.mubr.f32.gmra.mrb[0].mxu0 %v1002
    %v1072 = vpop.f32.mrb[0].mxu0
    %v1073 = vadd.f32 %v995, %v1072
    %v1074 = vpop.f32.mrb[0].mxu0
    %1075 = vmatprep.mubr.f32.mxu0 0.0
    %1076 = vmatmul.mubr.f32.gmra.mrb[0].mxu0 %v1004
    %v1077 = vpop.f32.mrb[0].mxu0
    %v1078 = vadd.f32 %v995, %v1077
    %v1079 = vpop.f32.mrb[0].mxu0
    %1080 = vdwg.mxu0
    %1081 = vst [vmem:[#allocation5] sm:$0xff] %v1073
    %1082 = vst [vmem:[#allocation5 + $0x8] sm:$0xff] %v1078
    %v1084 = vrot.slane %v983, 6
    %v1087 = vrot.slane %v977, 4
    %1088 = vrot.lane.b32.xlu0 %v1087, 64
    %v1089 = vpop.permute.xlu0 %1088
    %v1091 = vsel %vm984, %v1084, %v1089
    %1093 = vrot.lane.b32.xlu0 %v1091, 32
    %v1094 = vpop.permute.xlu0 %1093
    %vm1096 = vcmask 257024
    %1097 = vst.msk [vmem:[#allocation6] sm:$0xf] %vm1096, %v1094
    // Predicated region
    $region18: #{tpu_custom_call.1} parent=1 // pred_check
      _
    $region19: #{tpu_custom_call.1} parent=1 // pred_check_branch
      %1099 = sbr.rel (0) target = $region21
    $region20: #{tpu_custom_call.1} parent=1 // pred_region
      %s1101 = ssub.s32 256, 256
      %1102 = vsyncadd [#allocation4], %s1101
      %s1103 = sshll.u32 [#allocation5], 4
      %s1104 = int_to_ptr.vmem [resolvable:$true] %s1103
      %1109 = dma.vmem_to_hbm [thread:$0]  %s1104, 256, %s3, [#allocation4], 128, 128, 8
    $region21: #{tpu_custom_call.1} parent=1 // pred_fallthru
      _
    // Predicated region
    $region22: #{tpu_custom_call.1} parent=1 // pred_check
      _
    $region23: #{tpu_custom_call.1} parent=1 // pred_check_branch
      %1111 = sbr.rel (0) target = $region25
    $region24: #{tpu_custom_call.1} parent=1 // pred_region
      %s1113 = ssub.s32 64, 64
      %1114 = vsyncadd [#allocation7], %s1113
      %s1116 = sshll.u32 [#allocation6], 4
      %s1117 = int_to_ptr.vmem [resolvable:$true] %s1116
      %1119 = dma.vmem_to_hbm [thread:$0]  %s1117, 64, %s4, [#allocation7]
    $region25: #{tpu_custom_call.1} parent=1 // pred_fallthru
      _
    // Predicated region
    $region26: #{tpu_custom_call.1} parent=1 // pred_check
      _
    $region27: #{tpu_custom_call.1} parent=1 // pred_check_branch
      %1121 = sbr.rel (0) target = $region29
    $region28: #{tpu_custom_call.1} parent=1 // pred_region
      %1122 = dma.done [#allocation4], 256
    $region29: #{tpu_custom_call.1} parent=1 // pred_fallthru
      _
    // Predicated region
    $region30: #{tpu_custom_call.1} parent=1 // pred_check
      _
    $region31: #{tpu_custom_call.1} parent=1 // pred_check_branch
      %1124 = sbr.rel (0) target = $region33
    $region32: #{tpu_custom_call.1} parent=1 // pred_region
      %1125 = dma.done [#allocation7], 64
    $region33: #{tpu_custom_call.1} parent=1 // pred_fallthru
      _
    %1126 = vsyncpa [#allocation3], 1
    %1127 = vsyncpa [#allocation4], 1
    %1128 = vsyncpa [#allocation7], 1

</llo_original>
